<compile_context>
chip_gen: v5e
topology: v5e:2x2
jax: 0.10.0
libtpu: 0.0.40
codegen_flags: <defaults>
</compile_context>

<pallas_src>
import jax
import jax.numpy as jnp
from jax.experimental import pallas as pl
from jax.experimental.pallas import tpu as pltpu


_VMEM_LIMIT = 40 * 1024 * 1024           # < v7x 64 MiB physical, > 32 MiB scoped default
_RESIDENT_RHS_BUDGET = 24 * 1024 * 1024  # double-buffered resident-H budget


def _round_up(x, m):
    return ((x + m - 1) // m) * m


def _pick_tile(d, cap):
    """Largest tile <= cap dividing d (d is always a multiple of 128 here)."""
    if d <= cap:
        return d
    for t in (512, 384, 256, 128):
        if t <= cap and d % t == 0:
            return t
    return 128


# ---------------------------------------------------------------------------
# Kernel 1: dense transform  O = (X @ W) * row_scale + bias_row
# ---------------------------------------------------------------------------
def _transform_kernel(x_ref, w_ref, scale_ref, b_ref, o_ref):
    acc = jnp.dot(x_ref[...], w_ref[...], preferred_element_type=jnp.float32)
    o_ref[...] = (acc * scale_ref[...] + b_ref[...]).astype(o_ref.dtype)


def _transform(x_bf, w_bf, row_scale, bias_row, out_dtype):
    n_pad, f_pad = x_bf.shape
    d_out = w_bf.shape[1]
    tm = _pick_tile(n_pad, 256)
    tn = _pick_tile(d_out, 512)
    # TODO(synk): for extremely large feature dims (f_pad >> 8k) add a
    # reduction-tiled variant; full-F tiles fit common GCN datasets in VMEM.
    return pl.pallas_call(
        _transform_kernel,
        out_shape=jax.ShapeDtypeStruct((n_pad, d_out), out_dtype),
        grid_spec=pltpu.PrefetchScalarGridSpec(
            num_scalar_prefetch=0,
            grid=(n_pad // tm, d_out // tn),
            in_specs=[
                pl.BlockSpec((tm, f_pad), lambda i, j: (i, 0)),
                pl.BlockSpec((f_pad, tn), lambda i, j: (0, j)),
                pl.BlockSpec((tm, 1), lambda i, j: (i, 0)),
                pl.BlockSpec((1, tn), lambda i, j: (0, j)),
            ],
            out_specs=pl.BlockSpec((tm, tn), lambda i, j: (i, j)),
        ),
        compiler_params=pltpu.CompilerParams(
            dimension_semantics=("parallel", "parallel"),
            vmem_limit_bytes=_VMEM_LIMIT),
    )(x_bf, w_bf, row_scale, bias_row)


# ---------------------------------------------------------------------------
# Kernel 2: normalized aggregation  O = (A_hat @ H) * row_scale + bias_row
# A_hat is the raw (0/1 + self-loop) adjacency in bf16 (exact); both D^-1/2
# factors are applied as f32 row scalings (one baked into H upstream, one here).
# Output block (index constant across k) is the f32 accumulator: no scratch.
# ---------------------------------------------------------------------------
def _make_aggregate_kernel(tk, rhs_resident):
    def kernel(a_ref, h_ref, scale_ref, b_ref, o_ref):
        k = pl.program_id(2)

        @pl.when(k == 0)
        def _():
            o_ref[...] = jnp.zeros_like(o_ref)

        if rhs_resident:
            start = pl.multiple_of(k * tk, tk)
            h_blk = h_ref[pl.ds(start, tk), :]
        else:
            h_blk = h_ref[...]
        o_ref[...] += jnp.dot(a_ref[...], h_blk,
                              preferred_element_type=jnp.float32)

        @pl.when(k == pl.num_programs(2) - 1)
        def _():
            o_ref[...] = o_ref[...] * scale_ref[...] + b_ref[...]

    return kernel


def _aggregate(a_hat, rhs_bf, row_scale, bias_row):
    n_pad = a_hat.shape[0]
    d = rhs_bf.shape[1]
    tm = _pick_tile(n_pad, 512)
    tk = _pick_tile(n_pad, 512)
    tn = _pick_tile(d, 512)
    # Keep H fully VMEM-resident (constant over i/k) when it fits; then the
    # dominant N^2 adjacency stream is read from HBM exactly once per j tile.
    rhs_resident = 2 * n_pad * tn * rhs_bf.dtype.itemsize <= _RESIDENT_RHS_BUDGET
    if rhs_resident:
        rhs_spec = pl.BlockSpec((n_pad, tn), lambda i, j, k: (0, j))
    else:
        rhs_spec = pl.BlockSpec((tk, tn), lambda i, j, k: (k, j))

    flops = 2 * n_pad * n_pad * d + 2 * n_pad * d
    bytes_accessed = (n_pad * n_pad * 2          # A_hat (bf16)
                      + n_pad * d * 2            # H (bf16)
                      + n_pad * d * 4            # out (f32)
                      + n_pad * 4 + d * 4)       # row scale + bias
    return pl.pallas_call(
        _make_aggregate_kernel(tk, rhs_resident),
        out_shape=jax.ShapeDtypeStruct((n_pad, d), jnp.float32),
        grid_spec=pltpu.PrefetchScalarGridSpec(
            num_scalar_prefetch=0,
            grid=(n_pad // tm, d // tn, n_pad // tk),
            in_specs=[
                pl.BlockSpec((tm, tk), lambda i, j, k: (i, k)),
                rhs_spec,
                pl.BlockSpec((tm, 1), lambda i, j, k: (i, 0)),
                pl.BlockSpec((1, tn), lambda i, j, k: (0, j)),
            ],
            out_specs=pl.BlockSpec((tm, tn), lambda i, j, k: (i, j)),
        ),
        compiler_params=pltpu.CompilerParams(
            dimension_semantics=("parallel", "parallel", "arbitrary"),
            vmem_limit_bytes=_VMEM_LIMIT),
        cost_estimate=pl.CostEstimate(
            flops=flops, transcendentals=0, bytes_accessed=bytes_accessed),
    )(a_hat, rhs_bf, row_scale, bias_row)


# ---------------------------------------------------------------------------
# Kernel 3 (small graphs, N_pad <= 512): fused single-step
#   O = dinv * (A_hat @ (dinv * (X @ W))) + b
# ---------------------------------------------------------------------------
def _fused_kernel(a_ref, x_ref, w_ref, dinv_ref, b_ref, o_ref):
    h = jnp.dot(x_ref[...], w_ref[...], preferred_element_type=jnp.float32)
    hs = (h * dinv_ref[...]).astype(jnp.bfloat16)
    agg = jnp.dot(a_ref[...], hs, preferred_element_type=jnp.float32)
    o_ref[...] = (agg * dinv_ref[...] + b_ref[...]).astype(o_ref.dtype)


def _fused(a_hat, x_bf, w_bf, dinv_col, bias_row):
    n_pad, f_pad = x_bf.shape
    h_pad = w_bf.shape[1]
    return pl.pallas_call(
        _fused_kernel,
        out_shape=jax.ShapeDtypeStruct((n_pad, h_pad), jnp.float32),
        grid_spec=pltpu.PrefetchScalarGridSpec(
            num_scalar_prefetch=0,
            grid=(1,),
            in_specs=[
                pl.BlockSpec((n_pad, n_pad), lambda i: (0, 0)),
                pl.BlockSpec((n_pad, f_pad), lambda i: (0, 0)),
                pl.BlockSpec((f_pad, h_pad), lambda i: (0, 0)),
                pl.BlockSpec((n_pad, 1), lambda i: (0, 0)),
                pl.BlockSpec((1, h_pad), lambda i: (0, 0)),
            ],
            out_specs=pl.BlockSpec((n_pad, h_pad), lambda i: (0, 0)),
        ),
        compiler_params=pltpu.CompilerParams(
            dimension_semantics=("arbitrary",),
            vmem_limit_bytes=_VMEM_LIMIT),
    )(a_hat, x_bf, w_bf, dinv_col, bias_row)


@jax.jit
def gcn_body_forward(x, edge_index, weight, bias):
    """x: [N, F] f32, edge_index: [2, E] i32, weight: [H, F] f32, bias: [H] f32."""
    n, f = x.shape
    h = weight.shape[0]
    src, dst = edge_index[0], edge_index[1]

    # --- padded sizes (lane-dense outputs, MXU-aligned tiles) ---------------
    f_pad = _round_up(f, 128)
    h_pad = _round_up(h, 128)
    r = _round_up(n, 128)
    small = r <= 512
    n_pad = r if small else _round_up(n, 512)

    # --- O(E)/O(N) glue: degrees and D^-1/2 ----------------------------------
    deg = jnp.ones((n,), jnp.float32).at[dst].add(1.0)       # self loop + in-edges
    dinv = jnp.where(deg > 0, jax.lax.rsqrt(deg), 0.0)
    dinv_col = jnp.zeros((n_pad, 1), jnp.float32).at[:n, 0].set(dinv)

    # --- A_hat built once, directly padded, bf16 (small counts are exact) ---
    a_hat = jnp.zeros((n_pad, n_pad), jnp.bfloat16)
    a_hat = a_hat.at[dst, src].add(1.0)                       # message src -> dst
    diag = jnp.arange(n)
    a_hat = a_hat.at[diag, diag].add(1.0)                     # self loops

    w_bf = jnp.zeros((f_pad, h_pad), jnp.bfloat16).at[:f, :h].set(
        weight.T.astype(jnp.bfloat16))
    bias_row = jnp.zeros((1, h_pad), jnp.float32).at[0, :h].set(bias)

    if small:
        x_bf = jnp.zeros((n_pad, f_pad), jnp.bfloat16).at[:n, :f].set(
            x.astype(jnp.bfloat16))
        out_pad = _fused(a_hat, x_bf, w_bf, dinv_col, bias_row)
    elif h_pad <= f_pad:
        # order A:  out = dinv * (A_hat @ (dinv * (X @ Wt))) + b
        x_bf = jnp.zeros((n_pad, f_pad), jnp.bfloat16).at[:n, :f].set(
            x.astype(jnp.bfloat16))
        zeros_h = jnp.zeros((1, h_pad), jnp.float32)
        h_mat = _transform(x_bf, w_bf, dinv_col, zeros_h, jnp.bfloat16)
        out_pad = _aggregate(a_hat, h_mat, dinv_col, bias_row)
    else:
        # order B:  out = (dinv * (A_hat @ (dinv * X))) @ Wt + b
        xs_bf = jnp.zeros((n_pad, f_pad), jnp.bfloat16).at[:n, :f].set(
            (x * dinv[:, None]).astype(jnp.bfloat16))
        zeros_f = jnp.zeros((1, f_pad), jnp.float32)
        y = _aggregate(a_hat, xs_bf, dinv_col, zeros_f)
        ones_col = jnp.ones((n_pad, 1), jnp.float32)
        out_pad = _transform(y.astype(jnp.bfloat16), w_bf, ones_col, bias_row,
                             jnp.float32)

    return out_pad[:n, :h]


def _reference(x, edge_index, weight, bias):
    n = x.shape[0]
    src, dst = edge_index[0], edge_index[1]
    adj = jnp.zeros((n, n), jnp.float32).at[dst, src].add(1.0) + jnp.eye(n)
    deg = adj.sum(axis=1)
    dinv = jnp.where(deg > 0, 1.0 / jnp.sqrt(deg), 0.0)
    a_norm = dinv[:, None] * adj * dinv[None, :]
    return a_norm @ (x @ weight.T) + bias[None, :]


if __name__ == "__main__":
    key = jax.random.PRNGKey(0)
    N, NFEAT, NHID = 8, 16, 32

    k_x, k_w = jax.random.split(key)
    x = jax.random.normal(k_x, (N, NFEAT), dtype=jnp.float32)

    # Deterministic glorot init for GCNConv linear weight [nhid, nfeat]; zero bias.
    limit = jnp.sqrt(6.0 / (NFEAT + NHID))
    weight = jax.random.uniform(
        k_w, (NHID, NFEAT), minval=-limit, maxval=limit, dtype=jnp.float32
    )
    bias = jnp.zeros((NHID,), jnp.float32)

    # Small deterministic graph: bidirectional ring over N nodes.
    src = jnp.arange(N, dtype=jnp.int32)
    dst = (src + 1) % N
    edge_index = jnp.stack(
        [jnp.concatenate([src, dst]), jnp.concatenate([dst, src])], axis=0
    )  # [2, 2N]

    out = gcn_body_forward(x, edge_index, weight, bias)
    out = jax.block_until_ready(out)

    ref = _reference(x, edge_index, weight, bias)
    assert out.shape == (N, NHID)
    # bf16 MXU operands (exact 0/1 adjacency, f32 accumulation & normalization)
    assert jnp.allclose(out, ref, atol=3e-2, rtol=3e-2)

    print("KERNEL_OK")
</pallas_src>

<mosaic_0001>
module attributes {stable_mosaic.version = 11 : i64} {
  func.func @_fused_kernel(%arg0: i32, %arg1: memref<128x128xbf16, #tpu.memory_space<vmem>>, %arg2: memref<128x128xbf16, #tpu.memory_space<vmem>>, %arg3: memref<128x128xbf16, #tpu.memory_space<vmem>>, %arg4: memref<128x1xf32, #tpu.memory_space<vmem>>, %arg5: memref<1x128xf32, #tpu.memory_space<vmem>>, %arg6: memref<128x128xf32, #tpu.memory_space<vmem>>) attributes {dimension_semantics = [#tpu.dimension_semantics<arbitrary>], iteration_bounds = array<i64: 1>, scalar_prefetch = 0 : i64, scratch_operands = 0 : i64, tpu.core_type = #tpu.core_type<tc>, window_params = [{pipeline_mode = #tpu.pipeline_mode<synchronous>, transform_indices = @transform_0, window_bounds = array<i64: 128, 128>}, {pipeline_mode = #tpu.pipeline_mode<synchronous>, transform_indices = @transform_1, window_bounds = array<i64: 128, 128>}, {pipeline_mode = #tpu.pipeline_mode<synchronous>, transform_indices = @transform_2, window_bounds = array<i64: 128, 128>}, {pipeline_mode = #tpu.pipeline_mode<synchronous>, transform_indices = @transform_3, window_bounds = array<i64: 128, 1>}, {pipeline_mode = #tpu.pipeline_mode<synchronous>, transform_indices = @transform_4, window_bounds = array<i64: 1, 128>}, {pipeline_mode = #tpu.pipeline_mode<synchronous>, transform_indices = @transform_5, window_bounds = array<i64: 128, 128>}]} {
    %c0 = arith.constant 0 : index
    %c0_0 = arith.constant 0 : index
    %0 = vector.load %arg2[%c0, %c0_0] : memref<128x128xbf16, #tpu.memory_space<vmem>>, vector<128x128xbf16>
    %c0_1 = arith.constant 0 : index
    %c0_2 = arith.constant 0 : index
    %1 = vector.load %arg3[%c0_1, %c0_2] : memref<128x128xbf16, #tpu.memory_space<vmem>>, vector<128x128xbf16>
    %cst = arith.constant dense<0.000000e+00> : vector<128x128xf32>
    %2 = tpu.matmul %0, %1, %cst {dimension_numbers = #tpu.dot_dimension_numbers<[1], [0], [0], [1], [0, 0, 1, 1], [], []>} : vector<128x128xbf16>, vector<128x128xbf16>, vector<128x128xf32> -> vector<128x128xf32>
    %c0_3 = arith.constant 0 : index
    %c0_4 = arith.constant 0 : index
    %3 = vector.load %arg4[%c0_3, %c0_4] : memref<128x1xf32, #tpu.memory_space<vmem>>, vector<128x1xf32>
    %4 = vector.broadcast %3 : vector<128x1xf32> to vector<128x128xf32>
    %5 = arith.mulf %2, %4 : vector<128x128xf32>
    %6 = arith.truncf %5 : vector<128x128xf32> to vector<128x128xbf16>
    %c0_5 = arith.constant 0 : index
    %c0_6 = arith.constant 0 : index
    %7 = vector.load %arg1[%c0_5, %c0_6] : memref<128x128xbf16, #tpu.memory_space<vmem>>, vector<128x128xbf16>
    %cst_7 = arith.constant dense<0.000000e+00> : vector<128x128xf32>
    %8 = tpu.matmul %7, %6, %cst_7 {dimension_numbers = #tpu.dot_dimension_numbers<[1], [0], [0], [1], [0, 0, 1, 1], [], []>} : vector<128x128xbf16>, vector<128x128xbf16>, vector<128x128xf32> -> vector<128x128xf32>
    %c0_8 = arith.constant 0 : index
    %c0_9 = arith.constant 0 : index
    %9 = vector.load %arg4[%c0_8, %c0_9] : memref<128x1xf32, #tpu.memory_space<vmem>>, vector<128x1xf32>
    %10 = vector.broadcast %9 : vector<128x1xf32> to vector<128x128xf32>
    %11 = arith.mulf %8, %10 : vector<128x128xf32>
    %c0_10 = arith.constant 0 : index
    %c0_11 = arith.constant 0 : index
    %12 = vector.load %arg5[%c0_10, %c0_11] : memref<1x128xf32, #tpu.memory_space<vmem>>, vector<1x128xf32>
    %13 = vector.broadcast %12 : vector<1x128xf32> to vector<128x128xf32>
    %14 = arith.addf %11, %13 : vector<128x128xf32>
    %c0_12 = arith.constant 0 : index
    %c0_13 = arith.constant 0 : index
    %15 = vector.load %arg6[%c0_12, %c0_13] : memref<128x128xf32, #tpu.memory_space<vmem>>, vector<128x128xf32>
    tpu.vector_store %arg6[%c0_12, %c0_13], %14 {strides = array<i32>} : memref<128x128xf32, #tpu.memory_space<vmem>>, vector<128x128xf32>,
    return
  }
  func.func @transform_0(%arg0: i32) -> (i32, i32) {
    %c0_i32 = arith.constant 0 : i32
    %c0_i32_0 = arith.constant 0 : i32
    %c0_i32_1 = arith.constant 0 : i32
    return %c0_i32, %c0_i32_0 : i32, i32
  }
  func.func @transform_1(%arg0: i32) -> (i32, i32) {
    %c0_i32 = arith.constant 0 : i32
    %c0_i32_0 = arith.constant 0 : i32
    %c0_i32_1 = arith.constant 0 : i32
    return %c0_i32, %c0_i32_0 : i32, i32
  }
  func.func @transform_2(%arg0: i32) -> (i32, i32) {
    %c0_i32 = arith.constant 0 : i32
    %c0_i32_0 = arith.constant 0 : i32
    %c0_i32_1 = arith.constant 0 : i32
    return %c0_i32, %c0_i32_0 : i32, i32
  }
  func.func @transform_3(%arg0: i32) -> (i32, i32) {
    %c0_i32 = arith.constant 0 : i32
    %c0_i32_0 = arith.constant 0 : i32
    %c0_i32_1 = arith.constant 0 : i32
    return %c0_i32, %c0_i32_0 : i32, i32
  }
  func.func @transform_4(%arg0: i32) -> (i32, i32) {
    %c0_i32 = arith.constant 0 : i32
    %c0_i32_0 = arith.constant 0 : i32
    %c0_i32_1 = arith.constant 0 : i32
    return %c0_i32, %c0_i32_0 : i32, i32
  }
  func.func @transform_5(%arg0: i32) -> (i32, i32) {
    %c0_i32 = arith.constant 0 : i32
    %c0_i32_0 = arith.constant 0 : i32
    %c0_i32_1 = arith.constant 0 : i32
    return %c0_i32, %c0_i32_0 : i32, i32
  }
}

</mosaic_0001>

<llo_original>
// kernel: gcn_body_forward.1
$region0: #{gcn_body_forward.1}
  #allocation0 [shape = 'u32[]', space=smem, size = 0x4, offset = 0x4, fixed_abs, tag = 'smem constant byte address 0x4 - core index']
  #allocation1 [shape = 'u32[72,128]{1,0:T(1,128)}', space=vmem, size = 0x9000, scoped, tag = 'internal scratch']
  %s0 = inlined_call_operand.vmem [shape: bf16[128,128], index: 0, kind: input, shape index: {}]
  %s1 = inlined_call_operand.vmem [shape: bf16[128,128], index: 1, kind: input, shape index: {}]
  %s2 = inlined_call_operand.vmem [shape: bf16[128,128], index: 2, kind: input, shape index: {}]
  %s3 = inlined_call_operand.vmem [shape: f32[128,1], index: 3, kind: input, shape index: {}]
  %s4 = inlined_call_operand.vmem [shape: f32[1,128], index: 4, kind: input, shape index: {}]
  %s5 = inlined_call_operand.vmem [shape: f32[128,128], index: 5, kind: output, shape index: {}]
  %s6 = sld [smem:[#allocation0]]
  $region30: #{gcn_body_forward.1} parent=0
    _
  %s8 = ssub.s32 1, %s6
  %s9 = scalar_select 0, %s8, %s6
  // Predicated region
  $region2: #{gcn_body_forward.1} parent=0 // pred_check
    _
  $region3: #{gcn_body_forward.1} parent=0 // pred_check_branch
    %11 = sbr.rel (0) target = $region5
  $region4: #{gcn_body_forward.1} parent=0 // pred_region
    _
  $region5: #{gcn_body_forward.1} parent=0 // pred_fallthru
    _
  // Predicated region
  $region6: #{gcn_body_forward.1} parent=0 // pred_check
    _
  $region7: #{gcn_body_forward.1} parent=0 // pred_check_branch
    %13 = sbr.rel (0) target = $region9
  $region8: #{gcn_body_forward.1} parent=0 // pred_region
    _
  $region9: #{gcn_body_forward.1} parent=0 // pred_fallthru
    _
  // Predicated region
  $region10: #{gcn_body_forward.1} parent=0 // pred_check
    _
  $region11: #{gcn_body_forward.1} parent=0 // pred_check_branch
    %15 = sbr.rel (0) target = $region13
  $region12: #{gcn_body_forward.1} parent=0 // pred_region
    _
  $region13: #{gcn_body_forward.1} parent=0 // pred_fallthru
    _
  // Predicated region
  $region14: #{gcn_body_forward.1} parent=0 // pred_check
    _
  $region15: #{gcn_body_forward.1} parent=0 // pred_check_branch
    %17 = sbr.rel (0) target = $region17
  $region16: #{gcn_body_forward.1} parent=0 // pred_region
    _
  $region17: #{gcn_body_forward.1} parent=0 // pred_fallthru
    _
  // Predicated region
  $region18: #{gcn_body_forward.1} parent=0 // pred_check
    _
  $region19: #{gcn_body_forward.1} parent=0 // pred_check_branch
    %19 = sbr.rel (0) target = $region21
  $region20: #{gcn_body_forward.1} parent=0 // pred_region
    _
  $region21: #{gcn_body_forward.1} parent=0 // pred_fallthru
    _
  %v20 = vld [vmem:[%s1] sm:$0xf]
  %v21 = vld [vmem:[%s1 + $0x4] sm:$0xf]
  %v22 = vld [vmem:[%s1 + $0x8] sm:$0xf]
  %v23 = vld [vmem:[%s1 + $0xc] sm:$0xf]
  %v24 = vld [vmem:[%s1 + $0x10] sm:$0xf]
  %v25 = vld [vmem:[%s1 + $0x14] sm:$0xf]
  %v26 = vld [vmem:[%s1 + $0x18] sm:$0xf]
  %v27 = vld [vmem:[%s1 + $0x1c] sm:$0xf]
  %v28 = vld [vmem:[%s1 + $0x20] sm:$0xf]
  %v29 = vld [vmem:[%s1 + $0x24] sm:$0xf]
  %v30 = vld [vmem:[%s1 + $0x28] sm:$0xf]
  %v31 = vld [vmem:[%s1 + $0x2c] sm:$0xf]
  %v32 = vld [vmem:[%s1 + $0x30] sm:$0xf]
  %v33 = vld [vmem:[%s1 + $0x34] sm:$0xf]
  %v34 = vld [vmem:[%s1 + $0x38] sm:$0xf]
  %v35 = vld [vmem:[%s1 + $0x3c] sm:$0xf]
  %v36 = vld [vmem:[%s2] sm:$0xf]
  %v37 = vld [vmem:[%s2 + $0x4] sm:$0xf]
  %v38 = vld [vmem:[%s2 + $0x8] sm:$0xf]
  %v39 = vld [vmem:[%s2 + $0xc] sm:$0xf]
  %v40 = vld [vmem:[%s2 + $0x10] sm:$0xf]
  %v41 = vld [vmem:[%s2 + $0x14] sm:$0xf]
  %v42 = vld [vmem:[%s2 + $0x18] sm:$0xf]
  %v43 = vld [vmem:[%s2 + $0x1c] sm:$0xf]
  %v44 = vld [vmem:[%s2 + $0x20] sm:$0xf]
  %v45 = vld [vmem:[%s2 + $0x24] sm:$0xf]
  %v46 = vld [vmem:[%s2 + $0x28] sm:$0xf]
  %v47 = vld [vmem:[%s2 + $0x2c] sm:$0xf]
  %v48 = vld [vmem:[%s2 + $0x30] sm:$0xf]
  %v49 = vld [vmem:[%s2 + $0x34] sm:$0xf]
  %v50 = vld [vmem:[%s2 + $0x38] sm:$0xf]
  %v51 = vld [vmem:[%s2 + $0x3c] sm:$0xf]
  %v68 = vunpack.c.l.b16 %v20
  %v69 = vunpack.c.l.b16 %v21
  %v70 = vunpack.c.l.b16 %v22
  %v71 = vunpack.c.l.b16 %v23
  %v72 = vunpack.c.l.b16 %v24
  %v73 = vunpack.c.l.b16 %v25
  %v74 = vunpack.c.l.b16 %v26
  %v75 = vunpack.c.l.b16 %v27
  %v76 = vunpack.c.l.b16 %v28
  %v77 = vunpack.c.l.b16 %v29
  %v78 = vunpack.c.l.b16 %v30
  %v79 = vunpack.c.l.b16 %v31
  %v80 = vunpack.c.l.b16 %v32
  %v81 = vunpack.c.l.b16 %v33
  %v82 = vunpack.c.l.b16 %v34
  %v83 = vunpack.c.l.b16 %v35
  %v84 = vpack.c.b16 %v69, %v68
  %v85 = vpack.c.b16 %v71, %v70
  %v86 = vpack.c.b16 %v73, %v72
  %v87 = vpack.c.b16 %v75, %v74
  %v88 = vpack.c.b16 %v77, %v76
  %v89 = vpack.c.b16 %v79, %v78
  %v90 = vpack.c.b16 %v81, %v80
  %v91 = vpack.c.b16 %v83, %v82
  %v116 = vunpack.c.l.b16 %v36
  %v117 = vunpack.c.l.b16 %v37
  %v118 = vunpack.c.l.b16 %v38
  %v119 = vunpack.c.l.b16 %v39
  %v120 = vunpack.c.l.b16 %v40
  %v121 = vunpack.c.l.b16 %v41
  %v122 = vunpack.c.l.b16 %v42
  %v123 = vunpack.c.l.b16 %v43
  %v124 = vunpack.c.l.b16 %v44
  %v125 = vunpack.c.l.b16 %v45
  %v126 = vunpack.c.l.b16 %v46
  %v127 = vunpack.c.l.b16 %v47
  %v128 = vunpack.c.l.b16 %v48
  %v129 = vunpack.c.l.b16 %v49
  %v130 = vunpack.c.l.b16 %v50
  %v131 = vunpack.c.l.b16 %v51
  %v132 = vpack.c.b16 %v117, %v116
  %v133 = vpack.c.b16 %v119, %v118
  %v134 = vpack.c.b16 %v121, %v120
  %v135 = vpack.c.b16 %v123, %v122
  %v136 = vpack.c.b16 %v125, %v124
  %v137 = vpack.c.b16 %v127, %v126
  %v138 = vpack.c.b16 %v129, %v128
  %v139 = vpack.c.b16 %v131, %v130
  %148 = vmatpush.bf16.msra.mxu0 %v139
  %149 = vmatpush.bf16.msra.mxu0 %v138
  %150 = vmatpush.bf16.msra.mxu0 %v137
  %151 = vmatpush.bf16.msra.mxu0 %v136
  %152 = vmatpush.bf16.msra.mxu0 %v135
  %153 = vmatpush.bf16.msra.mxu0 %v134
  %154 = vmatpush.bf16.msra.mxu0 %v133
  %155 = vmatpush.bf16.msra.mxu0 %v132
  %156 = vmatmul.bf16.gmra.mxu0 %v84
  %v157 = vpop.f32.mrf.mxu0
  %v158 = vadd.f32 0.0, %v157
  %v159 = vpop.f32.mrf.mxu0
  %v160 = vadd.f32 0.0, %v159
  %161 = vmatmul.bf16.gmra.mxu0 %v85
  %v162 = vpop.f32.mrf.mxu0
  %v163 = vadd.f32 0.0, %v162
  %v164 = vpop.f32.mrf.mxu0
  %v165 = vadd.f32 0.0, %v164
  %166 = vmatmul.bf16.gmra.mxu0 %v86
  %v167 = vpop.f32.mrf.mxu0
  %v168 = vadd.f32 0.0, %v167
  %v169 = vpop.f32.mrf.mxu0
  %v170 = vadd.f32 0.0, %v169
  %171 = vmatmul.bf16.gmra.mxu0 %v87
  %v172 = vpop.f32.mrf.mxu0
  %v173 = vadd.f32 0.0, %v172
  %v174 = vpop.f32.mrf.mxu0
  %v175 = vadd.f32 0.0, %v174
  %176 = vmatmul.bf16.gmra.mxu0 %v88
  %v177 = vpop.f32.mrf.mxu0
  %v178 = vadd.f32 0.0, %v177
  %v179 = vpop.f32.mrf.mxu0
  %v180 = vadd.f32 0.0, %v179
  %181 = vmatmul.bf16.gmra.mxu0 %v89
  %v182 = vpop.f32.mrf.mxu0
  %v183 = vadd.f32 0.0, %v182
  %v184 = vpop.f32.mrf.mxu0
  %v185 = vadd.f32 0.0, %v184
  %186 = vmatmul.bf16.gmra.mxu0 %v90
  %v187 = vpop.f32.mrf.mxu0
  %v188 = vadd.f32 0.0, %v187
  %v189 = vpop.f32.mrf.mxu0
  %v190 = vadd.f32 0.0, %v189
  %191 = vmatmul.bf16.gmra.mxu0 %v91
  %v192 = vpop.f32.mrf.mxu0
  %v193 = vadd.f32 0.0, %v192
  %v194 = vpop.f32.mrf.mxu0
  %v195 = vadd.f32 0.0, %v194
  %196 = vdwg.mxu0
  %v197 = vld [vmem:[%s3] sm:$0xff]
  %v198 = vld [vmem:[%s3 + $0x8] sm:$0xff]
  %v199 = vld [vmem:[%s3 + $0x10] sm:$0xff]
  %v200 = vld [vmem:[%s3 + $0x18] sm:$0xff]
  %v201 = vld [vmem:[%s3 + $0x20] sm:$0xff]
  %v202 = vld [vmem:[%s3 + $0x28] sm:$0xff]
  %v203 = vld [vmem:[%s3 + $0x30] sm:$0xff]
  %v204 = vld [vmem:[%s3 + $0x38] sm:$0xff]
  %v205 = vld [vmem:[%s3 + $0x40] sm:$0xff]
  %v206 = vld [vmem:[%s3 + $0x48] sm:$0xff]
  %v207 = vld [vmem:[%s3 + $0x50] sm:$0xff]
  %v208 = vld [vmem:[%s3 + $0x58] sm:$0xff]
  %v209 = vld [vmem:[%s3 + $0x60] sm:$0xff]
  %v210 = vld [vmem:[%s3 + $0x68] sm:$0xff]
  %v211 = vld [vmem:[%s3 + $0x70] sm:$0xff]
  %v212 = vld [vmem:[%s3 + $0x78] sm:$0xff]
  %214 = vset.pattern.permute.xlu0 0
  %215 = vperm.xlu0 %214, %v197
  %v216 = vpop.permute.xlu0 %215
  %219 = vset.pattern.permute.xlu0 0
  %220 = vperm.xlu0 %219, %v198
  %v221 = vpop.permute.xlu0 %220
  %224 = vset.pattern.permute.xlu0 0
  %225 = vperm.xlu0 %224, %v199
  %v226 = vpop.permute.xlu0 %225
  %229 = vset.pattern.permute.xlu0 0
  %230 = vperm.xlu0 %229, %v200
  %v231 = vpop.permute.xlu0 %230
  %234 = vset.pattern.permute.xlu0 0
  %235 = vperm.xlu0 %234, %v201
  %v236 = vpop.permute.xlu0 %235
  %239 = vset.pattern.permute.xlu0 0
  %240 = vperm.xlu0 %239, %v202
  %v241 = vpop.permute.xlu0 %240
  %244 = vset.pattern.permute.xlu0 0
  %245 = vperm.xlu0 %244, %v203
  %v246 = vpop.permute.xlu0 %245
  %249 = vset.pattern.permute.xlu0 0
  %250 = vperm.xlu0 %249, %v204
  %v251 = vpop.permute.xlu0 %250
  %254 = vset.pattern.permute.xlu0 0
  %255 = vperm.xlu0 %254, %v205
  %v256 = vpop.permute.xlu0 %255
  %259 = vset.pattern.permute.xlu0 0
  %260 = vperm.xlu0 %259, %v206
  %v261 = vpop.permute.xlu0 %260
  %264 = vset.pattern.permute.xlu0 0
  %265 = vperm.xlu0 %264, %v207
  %v266 = vpop.permute.xlu0 %265
  %269 = vset.pattern.permute.xlu0 0
  %270 = vperm.xlu0 %269, %v208
  %v271 = vpop.permute.xlu0 %270
  %274 = vset.pattern.permute.xlu0 0
  %275 = vperm.xlu0 %274, %v209
  %v276 = vpop.permute.xlu0 %275
  %279 = vset.pattern.permute.xlu0 0
  %280 = vperm.xlu0 %279, %v210
  %v281 = vpop.permute.xlu0 %280
  %284 = vset.pattern.permute.xlu0 0
  %285 = vperm.xlu0 %284, %v211
  %v286 = vpop.permute.xlu0 %285
  %289 = vset.pattern.permute.xlu0 0
  %290 = vperm.xlu0 %289, %v212
  %v291 = vpop.permute.xlu0 %290
  %v293 = vmul.f32 %v158, %v216
  %v294 = vmul.f32 %v160, %v221
  %v295 = vmul.f32 %v163, %v226
  %v296 = vmul.f32 %v165, %v231
  %v297 = vmul.f32 %v168, %v236
  %v298 = vmul.f32 %v170, %v241
  %v299 = vmul.f32 %v173, %v246
  %v300 = vmul.f32 %v175, %v251
  %v301 = vmul.f32 %v178, %v256
  %v302 = vmul.f32 %v180, %v261
  %v303 = vmul.f32 %v183, %v266
  %v304 = vmul.f32 %v185, %v271
  %v305 = vmul.f32 %v188, %v276
  %v306 = vmul.f32 %v190, %v281
  %v307 = vmul.f32 %v193, %v286
  %v308 = vmul.f32 %v195, %v291
  %v309 = vpack.c.bf16 %v294, %v293
  %v310 = vpack.c.bf16 %v296, %v295
  %v311 = vpack.c.bf16 %v298, %v297
  %v312 = vpack.c.bf16 %v300, %v299
  %v313 = vpack.c.bf16 %v302, %v301
  %v314 = vpack.c.bf16 %v304, %v303
  %v315 = vpack.c.bf16 %v306, %v305
  %v316 = vpack.c.bf16 %v308, %v307
  %v317 = vld [vmem:[%s0] sm:$0xf]
  %v318 = vld [vmem:[%s0 + $0x4] sm:$0xf]
  %v319 = vld [vmem:[%s0 + $0x8] sm:$0xf]
  %v320 = vld [vmem:[%s0 + $0xc] sm:$0xf]
  %v321 = vld [vmem:[%s0 + $0x10] sm:$0xf]
  %v322 = vld [vmem:[%s0 + $0x14] sm:$0xf]
  %v323 = vld [vmem:[%s0 + $0x18] sm:$0xf]
  %v324 = vld [vmem:[%s0 + $0x1c] sm:$0xf]
  %v325 = vld [vmem:[%s0 + $0x20] sm:$0xf]
  %v326 = vld [vmem:[%s0 + $0x24] sm:$0xf]
  %v327 = vld [vmem:[%s0 + $0x28] sm:$0xf]
  %v328 = vld [vmem:[%s0 + $0x2c] sm:$0xf]
  %v329 = vld [vmem:[%s0 + $0x30] sm:$0xf]
  %v330 = vld [vmem:[%s0 + $0x34] sm:$0xf]
  %v331 = vld [vmem:[%s0 + $0x38] sm:$0xf]
  %v332 = vld [vmem:[%s0 + $0x3c] sm:$0xf]
  %v349 = vunpack.c.l.b16 %v317
  %v350 = vunpack.c.l.b16 %v318
  %v351 = vunpack.c.l.b16 %v319
  %v352 = vunpack.c.l.b16 %v320
  %v353 = vunpack.c.l.b16 %v321
  %v354 = vunpack.c.l.b16 %v322
  %v355 = vunpack.c.l.b16 %v323
  %v356 = vunpack.c.l.b16 %v324
  %v357 = vunpack.c.l.b16 %v325
  %v358 = vunpack.c.l.b16 %v326
  %v359 = vunpack.c.l.b16 %v327
  %v360 = vunpack.c.l.b16 %v328
  %v361 = vunpack.c.l.b16 %v329
  %v362 = vunpack.c.l.b16 %v330
  %v363 = vunpack.c.l.b16 %v331
  %v364 = vunpack.c.l.b16 %v332
  %v365 = vpack.c.b16 %v350, %v349
  %v366 = vpack.c.b16 %v352, %v351
  %v367 = vpack.c.b16 %v354, %v353
  %v368 = vpack.c.b16 %v356, %v355
  %v369 = vpack.c.b16 %v358, %v357
  %v370 = vpack.c.b16 %v360, %v359
  %v371 = vpack.c.b16 %v362, %v361
  %v372 = vpack.c.b16 %v364, %v363
  %381 = vmatpush.bf16.msra.mxu0 %v316
  %382 = vmatpush.bf16.msra.mxu0 %v315
  %383 = vmatpush.bf16.msra.mxu0 %v314
  %384 = vmatpush.bf16.msra.mxu0 %v313
  %385 = vmatpush.bf16.msra.mxu0 %v312
  %386 = vmatpush.bf16.msra.mxu0 %v311
  %387 = vmatpush.bf16.msra.mxu0 %v310
  %388 = vmatpush.bf16.msra.mxu0 %v309
  %389 = vmatmul.bf16.gmra.mxu0 %v365
  %v390 = vpop.f32.mrf.mxu0
  %v391 = vadd.f32 0.0, %v390
  %v392 = vpop.f32.mrf.mxu0
  %v393 = vadd.f32 0.0, %v392
  %394 = vmatmul.bf16.gmra.mxu0 %v366
  %v395 = vpop.f32.mrf.mxu0
  %v396 = vadd.f32 0.0, %v395
  %v397 = vpop.f32.mrf.mxu0
  %v398 = vadd.f32 0.0, %v397
  %399 = vmatmul.bf16.gmra.mxu0 %v367
  %v400 = vpop.f32.mrf.mxu0
  %v401 = vadd.f32 0.0, %v400
  %v402 = vpop.f32.mrf.mxu0
  %v403 = vadd.f32 0.0, %v402
  %404 = vmatmul.bf16.gmra.mxu0 %v368
  %v405 = vpop.f32.mrf.mxu0
  %v406 = vadd.f32 0.0, %v405
  %v407 = vpop.f32.mrf.mxu0
  %v408 = vadd.f32 0.0, %v407
  %409 = vmatmul.bf16.gmra.mxu0 %v369
  %v410 = vpop.f32.mrf.mxu0
  %v411 = vadd.f32 0.0, %v410
  %v412 = vpop.f32.mrf.mxu0
  %v413 = vadd.f32 0.0, %v412
  %414 = vmatmul.bf16.gmra.mxu0 %v370
  %v415 = vpop.f32.mrf.mxu0
  %v416 = vadd.f32 0.0, %v415
  %v417 = vpop.f32.mrf.mxu0
  %v418 = vadd.f32 0.0, %v417
  %419 = vmatmul.bf16.gmra.mxu0 %v371
  %v420 = vpop.f32.mrf.mxu0
  %v421 = vadd.f32 0.0, %v420
  %v422 = vpop.f32.mrf.mxu0
  %v423 = vadd.f32 0.0, %v422
  %424 = vmatmul.bf16.gmra.mxu0 %v372
  %v425 = vpop.f32.mrf.mxu0
  %v426 = vadd.f32 0.0, %v425
  %v427 = vpop.f32.mrf.mxu0
  %v428 = vadd.f32 0.0, %v427
  %429 = vdwg.mxu0
  %v430 = vmul.f32 %v391, %v216
  %v431 = vmul.f32 %v393, %v221
  %v432 = vmul.f32 %v396, %v226
  %v433 = vmul.f32 %v398, %v231
  %v434 = vmul.f32 %v401, %v236
  %v435 = vmul.f32 %v403, %v241
  %v436 = vmul.f32 %v406, %v246
  %v437 = vmul.f32 %v408, %v251
  %v438 = vmul.f32 %v411, %v256
  %v439 = vmul.f32 %v413, %v261
  %v440 = vmul.f32 %v416, %v266
  %v441 = vmul.f32 %v418, %v271
  %v442 = vmul.f32 %v421, %v276
  %v443 = vmul.f32 %v423, %v281
  %v444 = vmul.f32 %v426, %v286
  %v445 = vmul.f32 %v428, %v291
  %v446 = vld [vmem:[%s4] sm:$0x1]
  %v448 = vperm.slane %v446, 0
  %v450 = vadd.f32 %v430, %v448
  %v451 = vadd.f32 %v431, %v448
  %v452 = vadd.f32 %v432, %v448
  %v453 = vadd.f32 %v433, %v448
  %v454 = vadd.f32 %v434, %v448
  %v455 = vadd.f32 %v435, %v448
  %v456 = vadd.f32 %v436, %v448
  %v457 = vadd.f32 %v437, %v448
  %v458 = vadd.f32 %v438, %v448
  %v459 = vadd.f32 %v439, %v448
  %v460 = vadd.f32 %v440, %v448
  %v461 = vadd.f32 %v441, %v448
  %v462 = vadd.f32 %v442, %v448
  %v463 = vadd.f32 %v443, %v448
  %v464 = vadd.f32 %v444, %v448
  %v465 = vadd.f32 %v445, %v448
  %466 = vst [vmem:[%s5] sm:$0xff] %v450
  %467 = vst [vmem:[%s5 + $0x8] sm:$0xff] %v451
  %468 = vst [vmem:[%s5 + $0x10] sm:$0xff] %v452
  %469 = vst [vmem:[%s5 + $0x18] sm:$0xff] %v453
  %470 = vst [vmem:[%s5 + $0x20] sm:$0xff] %v454
  %471 = vst [vmem:[%s5 + $0x28] sm:$0xff] %v455
  %472 = vst [vmem:[%s5 + $0x30] sm:$0xff] %v456
  %473 = vst [vmem:[%s5 + $0x38] sm:$0xff] %v457
  %474 = vst [vmem:[%s5 + $0x40] sm:$0xff] %v458
  %475 = vst [vmem:[%s5 + $0x48] sm:$0xff] %v459
  %476 = vst [vmem:[%s5 + $0x50] sm:$0xff] %v460
  %477 = vst [vmem:[%s5 + $0x58] sm:$0xff] %v461
  %478 = vst [vmem:[%s5 + $0x60] sm:$0xff] %v462
  %479 = vst [vmem:[%s5 + $0x68] sm:$0xff] %v463
  %480 = vst [vmem:[%s5 + $0x70] sm:$0xff] %v464
  %481 = vst [vmem:[%s5 + $0x78] sm:$0xff] %v465
  // Predicated region
  $region22: #{gcn_body_forward.1} parent=0 // pred_check
    _
  $region23: #{gcn_body_forward.1} parent=0 // pred_check_branch
    %483 = sbr.rel (0) target = $region25
  $region24: #{gcn_body_forward.1} parent=0 // pred_region
    _
  $region25: #{gcn_body_forward.1} parent=0 // pred_fallthru
    _
  // Predicated region
  $region26: #{gcn_body_forward.1} parent=0 // pred_check
    _
  $region27: #{gcn_body_forward.1} parent=0 // pred_check_branch
    %485 = sbr.rel (0) target = $region29
  $region28: #{gcn_body_forward.1} parent=0 // pred_region
    _
  $region29: #{gcn_body_forward.1} parent=0 // pred_fallthru
    _

</llo_original>
